<compile_context>
chip_gen: v5e
topology: v5e:2x2
jax: 0.10.0
libtpu: 0.0.40
codegen_flags: <defaults>
</compile_context>

<pallas_src>
import jax
import jax.numpy as jnp
from jax.experimental import pallas as pl
from jax.experimental.pallas import tpu as pltpu


def _round_up(x, m):
    return ((x + m - 1) // m) * m


def _attention_kernel(feat_ref, hid_ref,
                      Uwt_ref, Ub_ref, Wwt_ref, Wb_ref, Aw_ref, Ab_ref,
                      alpha_ref, ctx_ref):
    BB, L, E = feat_ref.shape          # batch tile, num pixels, encoder_dim
    A = Uwt_ref.shape[1]               # attention_dim
    Lp = alpha_ref.shape[1]            # lane-padded L (multiple of 128)
    Ep = ctx_ref.shape[1]              # lane-padded E (multiple of 128)

    feat = feat_ref[...]               # (BB, L, E)  (f32 or bf16)
    hid = hid_ref[...]                 # (BB, D)

    # u_hs = U(features): lane-aligned MXU matmul with pre-transposed weight.
    feat2d = feat.reshape(BB * L, E)
    u_hs = jnp.dot(feat2d, Uwt_ref[...],
                   preferred_element_type=jnp.float32) + Ub_ref[...]    # (BB*L, A) f32
    u_hs = u_hs.reshape(BB, L, A)

    # w_ah = W(hidden_state)
    w_ah = jnp.dot(hid, Wwt_ref[...],
                   preferred_element_type=jnp.float32) + Wb_ref[...]    # (BB, A) f32

    # combined_states = tanh(u_hs + w_ah.unsqueeze(1))   -- f32 VPU/EUP math.
    combined = jnp.tanh(u_hs + w_ah[:, None, :])                        # (BB, L, A)

    # attention_scores = A(combined).squeeze(-1)
    # attention_dim is small in this test, so an elementwise mul + lane reduce
    # is fine.
    # TODO(synk): for production attention_dim (~512) switch this to an MXU
    # matvec against a 128-padded Aw_t tile.
    scores = jnp.sum(combined * Aw_ref[...], axis=2) + Ab_ref[...]      # (BB, L)

    # softmax over L (dim=1), f32; denominator via EUP approx reciprocal.
    m = jnp.max(scores, axis=1, keepdims=True)
    e = jnp.exp(scores - m)
    denom = jnp.sum(e, axis=1, keepdims=True)
    alpha = e * pl.reciprocal(denom, approx=True)                       # (BB, L) f32

    # context = sum_l alpha[b,l] * features[b,l,:]  -> batched MXU matmul.
    alpha3 = alpha[:, None, :].astype(feat.dtype)                       # (BB, 1, L)
    ctx = jnp.einsum('bql,ble->bqe', alpha3, feat,
                     preferred_element_type=jnp.float32)[:, 0, :]       # (BB, E) f32

    # Lane-dense stores: zero-pad the last dim up to a multiple of 128 so the
    # writes are full-lane stores instead of masked partial stores.
    if Lp > L:
        alpha = jnp.concatenate(
            [alpha, jnp.zeros((BB, Lp - L), dtype=alpha.dtype)], axis=1)
    if Ep > E:
        ctx = jnp.concatenate(
            [ctx, jnp.zeros((BB, Ep - E), dtype=ctx.dtype)], axis=1)
    alpha_ref[...] = alpha.astype(alpha_ref.dtype)
    ctx_ref[...] = ctx.astype(ctx_ref.dtype)


def attention_pallas(features, hidden_state, Uw, Ub, Ww, Wb, Aw, Ab,
                     *, mxu_dtype=None):
    """features: (B, L, E), hidden_state: (B, D).

    Weights follow torch.nn.Linear convention (y = x @ W.T + b):
      Uw: (A, E), Ub: (A,), Ww: (A, D), Wb: (A,), Aw: (1, A), Ab: (1,)
    mxu_dtype: optional dtype (e.g. jnp.bfloat16) for MXU matmul operands on
      v6e/v7x. Vector math (tanh/softmax) always stays in f32.
    Returns (alpha: (B, L), context: (B, E)) in float32.
    """
    B, L, E = features.shape
    A, D = Ww.shape

    # One-time host-side layout prep: pre-transposed projection weights (no
    # in-kernel transpose) and 2-D bias rows so every VMEM operand is >= 2-D.
    Uw_t = jnp.asarray(Uw).T                       # (E, A)
    Ww_t = jnp.asarray(Ww).T                       # (D, A)
    Ub2 = Ub.reshape(1, A).astype(jnp.float32)
    Wb2 = Wb.reshape(1, A).astype(jnp.float32)
    Aw2 = Aw.reshape(1, A).astype(jnp.float32)
    Ab2 = Ab.reshape(1, 1).astype(jnp.float32)

    if mxu_dtype is not None:
        features_in = features.astype(mxu_dtype)
        hidden_in = hidden_state.astype(mxu_dtype)
        Uw_t = Uw_t.astype(mxu_dtype)
        Ww_t = Ww_t.astype(mxu_dtype)
    else:
        features_in = features
        hidden_in = hidden_state

    # Lane-dense (multiple-of-128) output slabs; sliced back after the call.
    Lp = _round_up(L, 128)
    Ep = _round_up(E, 128)

    # Batch-tiled grid (parallel -> split across the 2 TensorCores on v7x).
    block_b = 8 if B % 8 == 0 else B
    grid = (pl.cdiv(B, block_b),)

    alpha_pad, ctx_pad = pl.pallas_call(
        _attention_kernel,
        grid=grid,
        in_specs=[
            pl.BlockSpec((block_b, L, E), lambda b: (b, 0, 0)),   # features
            pl.BlockSpec((block_b, D), lambda b: (b, 0)),         # hidden_state
            pl.BlockSpec((E, A), lambda b: (0, 0)),               # Uw_t
            pl.BlockSpec((1, A), lambda b: (0, 0)),               # Ub
            pl.BlockSpec((D, A), lambda b: (0, 0)),               # Ww_t
            pl.BlockSpec((1, A), lambda b: (0, 0)),               # Wb
            pl.BlockSpec((1, A), lambda b: (0, 0)),               # Aw
            pl.BlockSpec((1, 1), lambda b: (0, 0)),               # Ab
        ],
        out_specs=(
            pl.BlockSpec((block_b, Lp), lambda b: (b, 0)),        # alpha (padded)
            pl.BlockSpec((block_b, Ep), lambda b: (b, 0)),        # context (padded)
        ),
        out_shape=(
            jax.ShapeDtypeStruct((B, Lp), jnp.float32),
            jax.ShapeDtypeStruct((B, Ep), jnp.float32),
        ),
        compiler_params=pltpu.CompilerParams(
            dimension_semantics=("parallel",),
            vmem_limit_bytes=32 * 1024 * 1024,
        ),
    )(features_in, hidden_in, Uw_t, Ub2, Ww_t, Wb2, Aw2, Ab2)

    return alpha_pad[:, :L], ctx_pad[:, :E]


def attention_reference(features, hidden_state, Uw, Ub, Ww, Wb, Aw, Ab):
    u_hs = features @ Uw.T + Ub                       # (B, L, A)
    w_ah = hidden_state @ Ww.T + Wb                   # (B, A)
    combined = jnp.tanh(u_hs + w_ah[:, None, :])      # (B, L, A)
    scores = (combined @ Aw.T)[..., 0] + Ab[0]        # (B, L)
    alpha = jax.nn.softmax(scores, axis=1)            # (B, L)
    ctx = jnp.sum(features * alpha[:, :, None], axis=1)
    return alpha, ctx


if __name__ == "__main__":
    # Small shapes consistent with the module's forward.
    B, L = 2, 8                 # batch, number of annotation vectors ("pixels")
    encoder_dim = 32
    decoder_dim = 16
    attention_dim = 16

    key = jax.random.PRNGKey(0)
    ks = jax.random.split(key, 8)

    features = jax.random.normal(ks[0], (B, L, encoder_dim), dtype=jnp.float32)
    hidden = jax.random.normal(ks[1], (B, decoder_dim), dtype=jnp.float32)

    # Deterministic parameter init (nn.Linear-style uniform fan-in scaling).
    def linear_init(k, out_f, in_f):
        kw, kb = jax.random.split(k)
        bound = 1.0 / jnp.sqrt(in_f)
        w = jax.random.uniform(kw, (out_f, in_f), jnp.float32, -bound, bound)
        b = jax.random.uniform(kb, (out_f,), jnp.float32, -bound, bound)
        return w, b

    Ww, Wb = linear_init(ks[2], attention_dim, decoder_dim)   # self.W
    Uw, Ub = linear_init(ks[3], attention_dim, encoder_dim)   # self.U
    Aw, Ab = linear_init(ks[4], 1, attention_dim)             # self.A

    alpha_ref, ctx_ref = attention_reference(features, hidden, Uw, Ub, Ww, Wb, Aw, Ab)

    # f32 MXU path (approx reciprocal in the softmax -> slightly relaxed tol).
    alpha, ctx = attention_pallas(features, hidden, Uw, Ub, Ww, Wb, Aw, Ab)
    jax.block_until_ready((alpha, ctx))
    assert alpha.shape == (B, L) and ctx.shape == (B, encoder_dim)
    assert jnp.allclose(alpha, alpha_ref, atol=1e-3, rtol=1e-3), "alpha mismatch (f32)"
    assert jnp.allclose(ctx, ctx_ref, atol=1e-3, rtol=1e-3), "context mismatch (f32)"

    # bf16 MXU-operand path (v6e/v7x oriented); vector math stays f32.
    alpha_bf, ctx_bf = attention_pallas(features, hidden, Uw, Ub, Ww, Wb, Aw, Ab,
                                        mxu_dtype=jnp.bfloat16)
    jax.block_until_ready((alpha_bf, ctx_bf))
    assert jnp.allclose(alpha_bf, alpha_ref, atol=5e-2, rtol=5e-2), "alpha mismatch (bf16)"
    assert jnp.allclose(ctx_bf, ctx_ref, atol=5e-2, rtol=5e-2), "context mismatch (bf16)"

    print("KERNEL_OK")
</pallas_src>

<mosaic_0001>
module attributes {stable_mosaic.version = 11 : i64} {
  func.func @_attention_kernel(%arg0: i32, %arg1: memref<2x8x32xf32, #tpu.memory_space<vmem>>, %arg2: memref<2x16xf32, #tpu.memory_space<vmem>>, %arg3: memref<32x16xf32, #tpu.memory_space<vmem>>, %arg4: memref<1x16xf32, #tpu.memory_space<vmem>>, %arg5: memref<16x16xf32, #tpu.memory_space<vmem>>, %arg6: memref<1x16xf32, #tpu.memory_space<vmem>>, %arg7: memref<1x16xf32, #tpu.memory_space<vmem>>, %arg8: memref<1x1xf32, #tpu.memory_space<vmem>>, %arg9: memref<2x128xf32, #tpu.memory_space<vmem>>, %arg10: memref<2x128xf32, #tpu.memory_space<vmem>>) attributes {dimension_semantics = [#tpu.dimension_semantics<parallel>], iteration_bounds = array<i64: 1>, scalar_prefetch = 0 : i64, scratch_operands = 0 : i64, tpu.core_type = #tpu.core_type<tc>, window_params = [{transform_indices = @transform_0, window_bounds = array<i64: 2, 8, 32>}, {transform_indices = @transform_1, window_bounds = array<i64: 2, 16>}, {pipeline_mode = #tpu.pipeline_mode<synchronous>, transform_indices = @transform_2, window_bounds = array<i64: 32, 16>}, {pipeline_mode = #tpu.pipeline_mode<synchronous>, transform_indices = @transform_3, window_bounds = array<i64: 1, 16>}, {pipeline_mode = #tpu.pipeline_mode<synchronous>, transform_indices = @transform_4, window_bounds = array<i64: 16, 16>}, {pipeline_mode = #tpu.pipeline_mode<synchronous>, transform_indices = @transform_5, window_bounds = array<i64: 1, 16>}, {pipeline_mode = #tpu.pipeline_mode<synchronous>, transform_indices = @transform_6, window_bounds = array<i64: 1, 16>}, {pipeline_mode = #tpu.pipeline_mode<synchronous>, transform_indices = @transform_7, window_bounds = array<i64: 1, 1>}, {transform_indices = @transform_8, window_bounds = array<i64: 2, 128>}, {transform_indices = @transform_9, window_bounds = array<i64: 2, 128>}]} {
    %c0 = arith.constant 0 : index
    %c0_0 = arith.constant 0 : index
    %c0_1 = arith.constant 0 : index
    %0 = vector.load %arg1[%c0, %c0_0, %c0_1] : memref<2x8x32xf32, #tpu.memory_space<vmem>>, vector<2x8x32xf32>
    %c0_2 = arith.constant 0 : index
    %c0_3 = arith.constant 0 : index
    %1 = vector.load %arg2[%c0_2, %c0_3] : memref<2x16xf32, #tpu.memory_space<vmem>>, vector<2x16xf32>
    %2 = vector.shape_cast %0 : vector<2x8x32xf32> to vector<16x32xf32>
    %c0_4 = arith.constant 0 : index
    %c0_5 = arith.constant 0 : index
    %3 = vector.load %arg3[%c0_4, %c0_5] : memref<32x16xf32, #tpu.memory_space<vmem>>, vector<32x16xf32>
    %cst = arith.constant dense<0.000000e+00> : vector<16x16xf32>
    %4 = tpu.matmul %2, %3, %cst {dimension_numbers = #tpu.dot_dimension_numbers<[1], [0], [0], [1], [0, 0, 1, 1], [], []>} : vector<16x32xf32>, vector<32x16xf32>, vector<16x16xf32> -> vector<16x16xf32>
    %c0_6 = arith.constant 0 : index
    %c0_7 = arith.constant 0 : index
    %5 = vector.load %arg4[%c0_6, %c0_7] : memref<1x16xf32, #tpu.memory_space<vmem>>, vector<1x16xf32>
    %6 = vector.broadcast %5 : vector<1x16xf32> to vector<16x16xf32>
    %7 = arith.addf %4, %6 : vector<16x16xf32>
    %8 = vector.shape_cast %7 : vector<16x16xf32> to vector<2x8x16xf32>
    %c0_8 = arith.constant 0 : index
    %c0_9 = arith.constant 0 : index
    %9 = vector.load %arg5[%c0_8, %c0_9] : memref<16x16xf32, #tpu.memory_space<vmem>>, vector<16x16xf32>
    %cst_10 = arith.constant dense<0.000000e+00> : vector<2x16xf32>
    %10 = tpu.matmul %1, %9, %cst_10 {dimension_numbers = #tpu.dot_dimension_numbers<[1], [0], [0], [1], [0, 0, 1, 1], [], []>} : vector<2x16xf32>, vector<16x16xf32>, vector<2x16xf32> -> vector<2x16xf32>
    %c0_11 = arith.constant 0 : index
    %c0_12 = arith.constant 0 : index
    %11 = vector.load %arg6[%c0_11, %c0_12] : memref<1x16xf32, #tpu.memory_space<vmem>>, vector<1x16xf32>
    %12 = vector.broadcast %11 : vector<1x16xf32> to vector<2x16xf32>
    %13 = arith.addf %10, %12 : vector<2x16xf32>
    %14 = vector.shape_cast %13 : vector<2x16xf32> to vector<2x1x16xf32>
    %15 = vector.broadcast %14 : vector<2x1x16xf32> to vector<2x8x16xf32>
    %16 = arith.addf %8, %15 : vector<2x8x16xf32>
    %17 = math.tanh %16 : vector<2x8x16xf32>
    %c0_13 = arith.constant 0 : index
    %c0_14 = arith.constant 0 : index
    %18 = vector.load %arg7[%c0_13, %c0_14] : memref<1x16xf32, #tpu.memory_space<vmem>>, vector<1x16xf32>
    %19 = vector.shape_cast %18 : vector<1x16xf32> to vector<1x1x16xf32>
    %20 = vector.broadcast %19 : vector<1x1x16xf32> to vector<2x8x16xf32>
    %21 = arith.mulf %17, %20 : vector<2x8x16xf32>
    %cst_15 = arith.constant dense<0.000000e+00> : vector<2x8xf32>
    %22 = vector.multi_reduction <add>, %21, %cst_15 [2] : vector<2x8x16xf32> to vector<2x8xf32>
    %c0_16 = arith.constant 0 : index
    %c0_17 = arith.constant 0 : index
    %23 = vector.load %arg8[%c0_16, %c0_17] : memref<1x1xf32, #tpu.memory_space<vmem>>, vector<1x1xf32>
    %24 = vector.broadcast %23 : vector<1x1xf32> to vector<2x8xf32>
    %25 = arith.addf %22, %24 : vector<2x8xf32>
    %cst_18 = arith.constant dense<0xFF800000> : vector<2xf32>
    %26 = vector.multi_reduction <maximumf>, %25, %cst_18 [1] : vector<2x8xf32> to vector<2xf32>
    %27 = vector.shape_cast %26 : vector<2xf32> to vector<2x1xf32>
    %28 = vector.broadcast %27 : vector<2x1xf32> to vector<2x8xf32>
    %29 = arith.subf %25, %28 : vector<2x8xf32>
    %30 = math.exp %29 : vector<2x8xf32>
    %cst_19 = arith.constant dense<0.000000e+00> : vector<2xf32>
    %31 = vector.multi_reduction <add>, %30, %cst_19 [1] : vector<2x8xf32> to vector<2xf32>
    %32 = vector.shape_cast %31 : vector<2xf32> to vector<2x1xf32>
    %33 = tpu.reciprocal %32 {approx = true} : vector<2x1xf32> -> vector<2x1xf32>
    %34 = vector.broadcast %33 : vector<2x1xf32> to vector<2x8xf32>
    %35 = arith.mulf %30, %34 : vector<2x8xf32>
    %36 = vector.shape_cast %35 : vector<2x8xf32> to vector<2x1x8xf32>
    "tpu.trace_start"() <{level = 10 : i32, message = "bql,ble->bqe"}> : () -> ()
    %cst_20 = arith.constant dense<0.000000e+00> : vector<2x1x32xf32>
    %37 = tpu.matmul %36, %0, %cst_20 {dimension_numbers = #tpu.dot_dimension_numbers<[2], [1], [1], [2], [0, 0, 0, 1, 1, 2], [0], [0]>} : vector<2x1x8xf32>, vector<2x8x32xf32>, vector<2x1x32xf32> -> vector<2x1x32xf32>
    "tpu.trace_stop"() : () -> ()
    %38 = vector.shape_cast %37 : vector<2x1x32xf32> to vector<2x32xf32>
    %cst_21 = arith.constant 0.000000e+00 : f32
    %39 = vector.broadcast %cst_21 : f32 to vector<2x120xf32>
    %40 = tpu.concatenate %35, %39 in 1 : vector<2x8xf32>, vector<2x120xf32> -> vector<2x128xf32>
    %cst_22 = arith.constant 0.000000e+00 : f32
    %41 = vector.broadcast %cst_22 : f32 to vector<2x96xf32>
    %42 = tpu.concatenate %38, %41 in 1 : vector<2x32xf32>, vector<2x96xf32> -> vector<2x128xf32>
    %c0_23 = arith.constant 0 : index
    %c0_24 = arith.constant 0 : index
    %43 = vector.load %arg9[%c0_23, %c0_24] : memref<2x128xf32, #tpu.memory_space<vmem>>, vector<2x128xf32>
    tpu.vector_store %arg9[%c0_23, %c0_24], %40 {strides = array<i32>} : memref<2x128xf32, #tpu.memory_space<vmem>>, vector<2x128xf32>,
    %c0_25 = arith.constant 0 : index
    %c0_26 = arith.constant 0 : index
    %44 = vector.load %arg10[%c0_25, %c0_26] : memref<2x128xf32, #tpu.memory_space<vmem>>, vector<2x128xf32>
    tpu.vector_store %arg10[%c0_25, %c0_26], %42 {strides = array<i32>} : memref<2x128xf32, #tpu.memory_space<vmem>>, vector<2x128xf32>,
    return
  }
  func.func @transform_0(%arg0: i32) -> (i32, i32, i32) {
    %c0_i32 = arith.constant 0 : i32
    %c0_i32_0 = arith.constant 0 : i32
    %c0_i32_1 = arith.constant 0 : i32
    return %arg0, %c0_i32, %c0_i32_0 : i32, i32, i32
  }
  func.func @transform_1(%arg0: i32) -> (i32, i32) {
    %c0_i32 = arith.constant 0 : i32
    %c0_i32_0 = arith.constant 0 : i32
    return %arg0, %c0_i32 : i32, i32
  }
  func.func @transform_2(%arg0: i32) -> (i32, i32) {
    %c0_i32 = arith.constant 0 : i32
    %c0_i32_0 = arith.constant 0 : i32
    %c0_i32_1 = arith.constant 0 : i32
    return %c0_i32, %c0_i32_0 : i32, i32
  }
  func.func @transform_3(%arg0: i32) -> (i32, i32) {
    %c0_i32 = arith.constant 0 : i32
    %c0_i32_0 = arith.constant 0 : i32
    %c0_i32_1 = arith.constant 0 : i32
    return %c0_i32, %c0_i32_0 : i32, i32
  }
  func.func @transform_4(%arg0: i32) -> (i32, i32) {
    %c0_i32 = arith.constant 0 : i32
    %c0_i32_0 = arith.constant 0 : i32
    %c0_i32_1 = arith.constant 0 : i32
    return %c0_i32, %c0_i32_0 : i32, i32
  }
  func.func @transform_5(%arg0: i32) -> (i32, i32) {
    %c0_i32 = arith.constant 0 : i32
    %c0_i32_0 = arith.constant 0 : i32
    %c0_i32_1 = arith.constant 0 : i32
    return %c0_i32, %c0_i32_0 : i32, i32
  }
  func.func @transform_6(%arg0: i32) -> (i32, i32) {
    %c0_i32 = arith.constant 0 : i32
    %c0_i32_0 = arith.constant 0 : i32
    %c0_i32_1 = arith.constant 0 : i32
    return %c0_i32, %c0_i32_0 : i32, i32
  }
  func.func @transform_7(%arg0: i32) -> (i32, i32) {
    %c0_i32 = arith.constant 0 : i32
    %c0_i32_0 = arith.constant 0 : i32
    %c0_i32_1 = arith.constant 0 : i32
    return %c0_i32, %c0_i32_0 : i32, i32
  }
  func.func @transform_8(%arg0: i32) -> (i32, i32) {
    %c0_i32 = arith.constant 0 : i32
    %c0_i32_0 = arith.constant 0 : i32
    return %arg0, %c0_i32 : i32, i32
  }
  func.func @transform_9(%arg0: i32) -> (i32, i32) {
    %c0_i32 = arith.constant 0 : i32
    %c0_i32_0 = arith.constant 0 : i32
    return %arg0, %c0_i32 : i32, i32
  }
}

</mosaic_0001>

<llo_original>
// kernel: tpu_custom_call.1
$region0: #{tpu_custom_call.1}
  #allocation0 [shape = 'u32[]', space=smem, size = 0x4, offset = 0x4, fixed_abs, tag = 'smem constant byte address 0x4 - core index']
  #allocation1 [shape = 'u32[72,128]{1,0:T(1,128)}', space=vmem, size = 0x9000, scoped, tag = 'internal scratch']
  #allocation2 [shape = 'f32[1,1]{1,0:T(1,128)S(1)}', space=vmem, size = 0x200, scoped, tag = 'scoped memory for tpu_custom_call.1']
  %s0 = inlined_call_operand.vmem [shape: f32[2,8,32], index: 0, kind: input, shape index: {}]
  %s1 = inlined_call_operand.vmem [shape: f32[2,16], index: 1, kind: input, shape index: {}]
  %s2 = inlined_call_operand.vmem [shape: f32[32,16], index: 2, kind: input, shape index: {}]
  %s3 = inlined_call_operand.vmem [shape: f32[1,16], index: 3, kind: input, shape index: {}]
  %s4 = inlined_call_operand.vmem [shape: f32[16,16], index: 4, kind: input, shape index: {}]
  %s5 = inlined_call_operand.vmem [shape: f32[1,16], index: 5, kind: input, shape index: {}]
  %s6 = inlined_call_operand.vmem [shape: f32[1,16], index: 6, kind: input, shape index: {}]
  %s7 = inlined_call_operand.<no memory space> [shape: f32[1,1], index: 7, kind: input, shape index: {}]
  %s8 = inlined_call_operand.hbm [shape: f32[2,128], index: 8, kind: output, shape index: {0}]
  %s9 = inlined_call_operand.hbm [shape: f32[2,128], index: 9, kind: output, shape index: {1}]
  %10 = xla_tuple %s8, %s9
  %s11 = sld [smem:[#allocation0]]
  $region50: #{tpu_custom_call.1} parent=0
    _
  %s13 = ssub.s32 1, %s11
  %s14 = scalar_select 0, %s13, %s11
  %v15 = vstv %s7
  %16 = vst [vmem:[#allocation2] sm:$0x1] %v15
  $region1: #{tpu_custom_call.1} parent=0
    #allocation3 [shape = 'u8[1024]{0}', space=vmem, size = 0x400, scoped, tag = 'output window, operand 0, single buffered']
    #allocation4 [shape = 's32[1]{0}', space=sflag, size = 0x4, scoped, tag = 'scoped memory for tpu_custom_call.1']
    #allocation5 [shape = 'u8[1024]{0}', space=vmem, size = 0x400, scoped, tag = 'output window, operand 1, single buffered']
    #allocation6 [shape = 's32[1]{0}', space=sflag, size = 0x4, scoped, tag = 'scoped memory for tpu_custom_call.1']
    %17 = vsyncpa [#allocation4], 0
    %18 = vsyncpa [#allocation6], 0
    // Predicated region
    $region2: #{tpu_custom_call.1} parent=1 // pred_check
      _
    $region3: #{tpu_custom_call.1} parent=1 // pred_check_branch
      %20 = sbr.rel (0) target = $region5
    $region4: #{tpu_custom_call.1} parent=1 // pred_region
      _
    $region5: #{tpu_custom_call.1} parent=1 // pred_fallthru
      _
    // Predicated region
    $region6: #{tpu_custom_call.1} parent=1 // pred_check
      _
    $region7: #{tpu_custom_call.1} parent=1 // pred_check_branch
      %22 = sbr.rel (0) target = $region9
    $region8: #{tpu_custom_call.1} parent=1 // pred_region
      _
    $region9: #{tpu_custom_call.1} parent=1 // pred_fallthru
      _
    // Predicated region
    $region10: #{tpu_custom_call.1} parent=1 // pred_check
      _
    $region11: #{tpu_custom_call.1} parent=1 // pred_check_branch
      %24 = sbr.rel (0) target = $region13
    $region12: #{tpu_custom_call.1} parent=1 // pred_region
      _
    $region13: #{tpu_custom_call.1} parent=1 // pred_fallthru
      _
    // Predicated region
    $region14: #{tpu_custom_call.1} parent=1 // pred_check
      _
    $region15: #{tpu_custom_call.1} parent=1 // pred_check_branch
      %26 = sbr.rel (0) target = $region17
    $region16: #{tpu_custom_call.1} parent=1 // pred_region
      _
    $region17: #{tpu_custom_call.1} parent=1 // pred_fallthru
      _
    // Predicated region
    $region18: #{tpu_custom_call.1} parent=1 // pred_check
      _
    $region19: #{tpu_custom_call.1} parent=1 // pred_check_branch
      %28 = sbr.rel (0) target = $region21
    $region20: #{tpu_custom_call.1} parent=1 // pred_region
      _
    $region21: #{tpu_custom_call.1} parent=1 // pred_fallthru
      _
    // Predicated region
    $region22: #{tpu_custom_call.1} parent=1 // pred_check
      _
    $region23: #{tpu_custom_call.1} parent=1 // pred_check_branch
      %30 = sbr.rel (0) target = $region25
    $region24: #{tpu_custom_call.1} parent=1 // pred_region
      _
    $region25: #{tpu_custom_call.1} parent=1 // pred_fallthru
      _
    // Predicated region
    $region26: #{tpu_custom_call.1} parent=1 // pred_check
      _
    $region27: #{tpu_custom_call.1} parent=1 // pred_check_branch
      %32 = sbr.rel (0) target = $region29
    $region28: #{tpu_custom_call.1} parent=1 // pred_region
      _
    $region29: #{tpu_custom_call.1} parent=1 // pred_fallthru
      _
    // Predicated region
    $region30: #{tpu_custom_call.1} parent=1 // pred_check
      _
    $region31: #{tpu_custom_call.1} parent=1 // pred_check_branch
      %34 = sbr.rel (0) target = $region33
    $region32: #{tpu_custom_call.1} parent=1 // pred_region
      _
    $region33: #{tpu_custom_call.1} parent=1 // pred_fallthru
      _
    %v35 = vld [vmem:[%s0] sm:$0xff]
    %v36 = vld [vmem:[%s0 + $0x8] sm:$0xff]
    %v37 = vld [vmem:[%s1] sm:$0x3]
    %v38 = vld [vmem:[%s2] sm:$0xff]
    %v39 = vld [vmem:[%s2 + $0x8] sm:$0xff]
    %v40 = vld [vmem:[%s2 + $0x10] sm:$0xff]
    %v41 = vld [vmem:[%s2 + $0x18] sm:$0xff]
    %v42 = vld [vmem:[%s3] sm:$0x1]
    %v44 = vperm.slane %v42, 0
    %vm46 = vcmask 261120
    %v48 = vsel %vm46, %v35, 0
    %v51 = vsel %vm46, %v36, 0
    %53 = vmatpush.msra.mxu0 0.0
    %54 = vmatpush.msra.mxu0 0.0
    %55 = vmatpush.msra.mxu0 0.0
    %56 = vmatpush.msra.mxu0 0.0
    %57 = vmatpush.msra.mxu0 0.0
    %58 = vmatpush.msra.mxu0 0.0
    %59 = vmatpush.msra.mxu0 0.0
    %60 = vmatpush.msra.mxu0 0.0
    %61 = vmatpush.msra.mxu0 0.0
    %62 = vmatpush.msra.mxu0 0.0
    %63 = vmatpush.msra.mxu0 0.0
    %64 = vmatpush.msra.mxu0 0.0
    %65 = vmatpush.msra.mxu0 %v41
    %66 = vmatpush.msra.mxu0 %v40
    %67 = vmatpush.msra.mxu0 %v39
    %68 = vmatpush.msra.mxu0 %v38
    %69 = vmatmul.f32.gmra.mxu0 %v48
    %v70 = vpop.f32.mrf.mxu0
    %v71 = vadd.f32 %v44, %v70
    %72 = vmatmul.f32.gmra.mxu0 %v51
    %v73 = vpop.f32.mrf.mxu0
    %v74 = vadd.f32 %v44, %v73
    %75 = vdwg.mxu0
    %v76 = vld [vmem:[%s4] sm:$0xff]
    %v77 = vld [vmem:[%s4 + $0x8] sm:$0xff]
    %v78 = vld [vmem:[%s5] sm:$0x1]
    %v80 = vperm.slane %v78, 0
    %vm82 = vcmask 130048
    %v84 = vsel %vm82, %v37, 0
    %86 = vmatpush.msra.mxu0 0.0
    %87 = vmatpush.msra.mxu0 0.0
    %88 = vmatpush.msra.mxu0 0.0
    %89 = vmatpush.msra.mxu0 0.0
    %90 = vmatpush.msra.mxu0 0.0
    %91 = vmatpush.msra.mxu0 0.0
    %92 = vmatpush.msra.mxu0 0.0
    %93 = vmatpush.msra.mxu0 0.0
    %94 = vmatpush.msra.mxu0 0.0
    %95 = vmatpush.msra.mxu0 0.0
    %96 = vmatpush.msra.mxu0 0.0
    %97 = vmatpush.msra.mxu0 0.0
    %98 = vmatpush.msra.mxu0 0.0
    %99 = vmatpush.msra.mxu0 0.0
    %100 = vmatpush.msra.mxu0 %v77
    %101 = vmatpush.msra.mxu0 %v76
    %102 = vmatmul.f32.gmra.mxu0 %v84
    %v103 = vpop.f32.mrf.mxu0
    %v104 = vadd.f32 %v80, %v103
    %105 = vdwg.mxu0
    %v107 = vrot.slane %v104, 1
    %v108 = vperm.slane %v104, 0
    %v109 = vperm.slane %v107, 0
    %v112 = vadd.f32 %v71, %v108
    %v113 = vadd.f32 %v74, %v109
    %v114 = vtanh.pop %v112
    %v115 = vtanh.pop %v113
    %v116 = vld [vmem:[%s6] sm:$0x1]
    %v118 = vperm.slane %v116, 0
    %v120 = vmul.f32 %v114, %v118
    %v121 = vmul.f32 %v115, %v118
    %v122 = vsel %vm82, %v120, 0.0
    %123 = vadd.xlane.f32.xlu0 %v122
    %v124 = vpop.xlane.xlu0 %123
    %v125 = vsel %vm82, %v121, 0.0
    %126 = vadd.xlane.f32.xlu0 %v125
    %v127 = vpop.xlane.xlu0 %126
    %v128 = vld [vmem:[#allocation2] sm:$0x1]
    %v130 = vperm.slane %v128, 0
    %131 = vset.pattern.permute.xlu0 0
    %132 = vperm.xlu0 %131, %v130
    %v133 = vpop.permute.xlu0 %132
    %v135 = vadd.f32 %v124, %v133
    %v136 = vadd.f32 %v127, %v133
    %v139 = vlaneseq
    %v140 = vand.u32 %v139, 127
    %v141 = vperm.slane %v135, %v140
    %v142 = vperm.slane %v136, %v140
    %vm143 = vcmask 1041409
    %v144 = vsel %vm143, %v142, %v141
    %vm146 = vcmask 58368
    %v147 = vsel %vm146, %v144, -inf
    %148 = vmax.xlane.f32.xlu0 %v147
    %v149 = vpop.xlane.xlu0 %148
    %v151 = vperm.slane %v149, 0
    %v152 = vperm.slane %v149, 1
    %v155 = vsub.f32 %v135, %v151
    %v156 = vsub.f32 %v136, %v152
    %v157 = vmul.f32 %v155, 1.442695
    %v158 = vpow.pop %v157
    %v159 = vmul.f32 %v156, 1.442695
    %v160 = vpow.pop %v159
    %163 = vset.pattern.permute.xlu0 0
    %164 = vperm.xlu0 %163, %v158
    %v165 = vpop.permute.xlu0 %164
    %166 = vset.pattern.permute.xlu0 0
    %167 = vperm.xlu0 %166, %v160
    %v168 = vpop.permute.xlu0 %167
    %v169 = vperm.slane %v165, %v140
    %v170 = vperm.slane %v168, %v140
    %v171 = vsel %vm143, %v170, %v169
    %v173 = vsel %vm146, %v171, 0.0
    %174 = vadd.xlane.f32.xlu0 %v173
    %v175 = vpop.xlane.xlu0 %174
    %v176 = vrcp.pop %v175
    %v178 = vperm.slane %v176, 0
    %v179 = vperm.slane %v176, 1
    %v182 = vmul.f32 %v158, %v178
    %v183 = vmul.f32 %v160, %v179
    %185 = vset.pattern.permute.xlu0 0
    %186 = vperm.xlu0 %185, %v182
    %v187 = vpop.permute.xlu0 %186
    %v188 = vperm.slane %v187, %v140
    %vm189 = vcmask 64512
    %v190 = vsel %vm189, %v188, 0
    %192 = vmatpush.msra.mxu0 0.0
    %193 = vmatpush.msra.mxu0 0.0
    %194 = vmatpush.msra.mxu0 0.0
    %195 = vmatpush.msra.mxu0 0.0
    %196 = vmatpush.msra.mxu0 0.0
    %197 = vmatpush.msra.mxu0 0.0
    %198 = vmatpush.msra.mxu0 0.0
    %199 = vmatpush.msra.mxu0 0.0
    %200 = vmatpush.msra.mxu0 0.0
    %201 = vmatpush.msra.mxu0 0.0
    %202 = vmatpush.msra.mxu0 0.0
    %203 = vmatpush.msra.mxu0 0.0
    %204 = vmatpush.msra.mxu0 0.0
    %205 = vmatpush.msra.mxu0 0.0
    %206 = vmatpush.msra.mxu0 0.0
    %207 = vmatpush.msra.mxu0 %v35
    %208 = vmatmul.f32.gmra.mxu0 %v190
    %v209 = vpop.f32.mrf.mxu0
    %v210 = vadd.f32 0.0, %v209
    %211 = vdwg.mxu0
    %213 = vset.pattern.permute.xlu0 0
    %214 = vperm.xlu0 %213, %v183
    %v215 = vpop.permute.xlu0 %214
    %v216 = vperm.slane %v215, %v140
    %v217 = vsel %vm189, %v216, 0
    %219 = vmatpush.msra.mxu0 0.0
    %220 = vmatpush.msra.mxu0 0.0
    %221 = vmatpush.msra.mxu0 0.0
    %222 = vmatpush.msra.mxu0 0.0
    %223 = vmatpush.msra.mxu0 0.0
    %224 = vmatpush.msra.mxu0 0.0
    %225 = vmatpush.msra.mxu0 0.0
    %226 = vmatpush.msra.mxu0 0.0
    %227 = vmatpush.msra.mxu0 0.0
    %228 = vmatpush.msra.mxu0 0.0
    %229 = vmatpush.msra.mxu0 0.0
    %230 = vmatpush.msra.mxu0 0.0
    %231 = vmatpush.msra.mxu0 0.0
    %232 = vmatpush.msra.mxu0 0.0
    %233 = vmatpush.msra.mxu0 0.0
    %234 = vmatpush.msra.mxu0 %v36
    %235 = vmatmul.f32.gmra.mxu0 %v217
    %v236 = vpop.f32.mrf.mxu0
    %v237 = vadd.f32 0.0, %v236
    %238 = vdwg.mxu0
    %v239 = vsel %vm143, %v216, %v188
    %v241 = vsel %vm189, %v239, 0.0
    %v244 = vrot.slane %v237, 7
    %v245 = vsel %vm143, %v244, %v210
    %v247 = vsel %vm46, %v245, 0.0
    %248 = vst [vmem:[#allocation3] sm:$0x3] %v241
    %249 = vst [vmem:[#allocation5] sm:$0x3] %v247
    // Predicated region
    $region34: #{tpu_custom_call.1} parent=1 // pred_check
      _
    $region35: #{tpu_custom_call.1} parent=1 // pred_check_branch
      %251 = sbr.rel (0) target = $region37
    $region36: #{tpu_custom_call.1} parent=1 // pred_region
      %253 = vsyncadd [#allocation4], 0
      %s255 = sshll.u32 [#allocation3], 4
      %s256 = int_to_ptr.vmem [resolvable:$true] %s255
      %s257 = sshll.u32 %s8, 4
      %s258 = int_to_ptr.hbm [resolvable:$true] %s257
      %260 = dma.vmem_to_hbm [thread:$0]  %s256, 32, %s258, [#allocation4]
    $region37: #{tpu_custom_call.1} parent=1 // pred_fallthru
      _
    // Predicated region
    $region38: #{tpu_custom_call.1} parent=1 // pred_check
      _
    $region39: #{tpu_custom_call.1} parent=1 // pred_check_branch
      %262 = sbr.rel (0) target = $region41
    $region40: #{tpu_custom_call.1} parent=1 // pred_region
      %264 = vsyncadd [#allocation6], 0
      %s266 = sshll.u32 [#allocation5], 4
      %s267 = int_to_ptr.vmem [resolvable:$true] %s266
      %s268 = sshll.u32 %s9, 4
      %s269 = int_to_ptr.hbm [resolvable:$true] %s268
      %271 = dma.vmem_to_hbm [thread:$0]  %s267, 32, %s269, [#allocation6]
    $region41: #{tpu_custom_call.1} parent=1 // pred_fallthru
      _
    // Predicated region
    $region42: #{tpu_custom_call.1} parent=1 // pred_check
      _
    $region43: #{tpu_custom_call.1} parent=1 // pred_check_branch
      %273 = sbr.rel (0) target = $region45
    $region44: #{tpu_custom_call.1} parent=1 // pred_region
      %275 = dma.done [#allocation4], 32
    $region45: #{tpu_custom_call.1} parent=1 // pred_fallthru
      _
    // Predicated region
    $region46: #{tpu_custom_call.1} parent=1 // pred_check
      _
    $region47: #{tpu_custom_call.1} parent=1 // pred_check_branch
      %277 = sbr.rel (0) target = $region49
    $region48: #{tpu_custom_call.1} parent=1 // pred_region
      %279 = dma.done [#allocation6], 32
    $region49: #{tpu_custom_call.1} parent=1 // pred_fallthru
      _
    %280 = vsyncpa [#allocation4], 1
    %281 = vsyncpa [#allocation6], 1

</llo_original>
